<compile_context>
chip_gen: v7x
topology: tpu7x:2x2x1
jax: 0.10.0
libtpu: 0.0.40
codegen_flags: <defaults>
</compile_context>

<pallas_src>
import functools

import jax
import jax.numpy as jnp
from jax.experimental import pallas as pl
from jax.experimental.pallas import tpu as pltpu

ALPHA = 0.25
GAMMA = 2  # integer exponent -> plain VPU multiplies, never EUP pow()


def _focal_loss_kernel(xloc_ref, loc_ref, xconf_ref, label_ref,
                       out_loc_ref, out_conf_ref, out_npos_ref,
                       acc_loc, acc_conf, acc_npos,
                       *, alpha, gamma, n_valid, multicore):
    inner = 1 if multicore else 0
    i = pl.program_id(inner)
    n_inner = pl.num_programs(inner)

    @pl.when(i == 0)
    def _init():
        acc_loc[...] = jnp.zeros_like(acc_loc)
        acc_conf[...] = jnp.zeros_like(acc_conf)
        acc_npos[...] = jnp.zeros_like(acc_npos)

    # Global (unclamped) anchor-block index: gives exact tail masking even when
    # the DMA window of an overshoot block was clamped by the index_map.
    if multicore:
        blk = pl.program_id(0) * pl.num_programs(1) + pl.program_id(1)
    else:
        blk = pl.program_id(0)

    label = label_ref[...]                                      # (1, T) int32
    width = label.shape[-1]
    col = jax.lax.broadcasted_iota(jnp.int32, (1, width), 1)
    valid = (blk * width + col) < n_valid                       # (1, T) bool
    pos = valid & (label > 0)
    neg = valid & (label == 0)

    # ---- smooth-L1 localization loss, positive anchors only ----------------
    d = xloc_ref[...].astype(jnp.float32) - loc_ref[...].astype(jnp.float32)
    ad = jnp.abs(d)
    sl1 = jnp.where(ad < 1.0, 0.5 * d * d, ad - 0.5)            # (4, T)
    acc_loc[...] += jnp.where(pos, sl1, 0.0)                    # select: garbage-safe

    # ---- softmax focal loss (classes on sublanes, anchors on lanes) ---------
    x = xconf_ref[...].astype(jnp.float32)                      # (C, T)
    num_classes = x.shape[0]
    m = jnp.max(x, axis=0, keepdims=True)                       # (1, T)
    xm = x - m
    sumexp = jnp.sum(jnp.exp(xm), axis=0, keepdims=True)        # (1, T)

    tgt = jnp.clip(label, 0, num_classes - 1)                   # (1, T)
    cls_ids = jax.lax.broadcasted_iota(jnp.int32, x.shape, 0)   # (C, T)
    xt_m = jnp.sum(jnp.where(cls_ids == tgt, xm, 0.0),
                   axis=0, keepdims=True)                       # x_t - m  (1, T)

    logp = xt_m - jnp.log(sumexp)                               # log softmax at t
    p = jnp.exp(logp)                                           # exact; EUP slot

    omp = 1.0 - p
    w = jnp.ones_like(p)
    for _ in range(gamma):                                      # static int >= 0
        w = w * omp
    fl = -w * logp                                              # (1, T)

    acc_conf[...] += (jnp.where(pos, alpha * fl, 0.0)
                      + jnp.where(neg, (1.0 - alpha) * fl, 0.0))
    acc_npos[...] += jnp.where(pos, 1.0, 0.0)

    # ---- finish the reduction in-kernel on the last inner step --------------
    @pl.when(i == n_inner - 1)
    def _finalize():
        loc_lanes = jnp.sum(acc_loc[...], axis=0, keepdims=True)       # (1, T)
        out_loc_ref[...] = jnp.sum(loc_lanes, axis=1, keepdims=True)   # (1, 1)
        out_conf_ref[...] = jnp.sum(acc_conf[...], axis=1, keepdims=True)
        out_npos_ref[...] = jnp.sum(acc_npos[...], axis=1, keepdims=True)


def focal_loss_feature_major(xloc_fm, xconf_fm, loc_fm, label_fm, *,
                             alpha=ALPHA, gamma=GAMMA, tile=None, num_cores=1):
    """Focal loss on feature-major operands (zero wrapper relayout).

    xloc_fm, loc_fm: (4, N); xconf_fm: (C, N); label_fm: (N,) or (1, N).
    Returns (loc_loss / n_pos, conf_loss / n_pos) matching FocalLoss.forward.
    """
    if float(gamma) != int(gamma) or int(gamma) < 0:
        raise ValueError(f"gamma must be a non-negative integer, got {gamma!r}")
    gamma = int(gamma)
    alpha = float(alpha)

    C, N = xconf_fm.shape
    assert xloc_fm.shape == (4, N) and loc_fm.shape == (4, N)
    label_fm = jnp.reshape(label_fm, (1, N)).astype(jnp.int32)

    # Lane tile: large (amortizes ~0.35us/step pipeline overhead) but clamped
    # so double-buffered inputs + resident f32 accumulators stay under ~24 MiB
    # (inside every generation's scoped-VMEM defaults, incl. v7x).
    bytes_per_lane = (2 * (4 + 4 + C + 1) + 6) * 4
    vmem_budget = 24 * 1024 * 1024
    cap = max(128, (vmem_budget // bytes_per_lane) // 128 * 128)
    t = 32768 if tile is None else int(tile)
    t = min(t, cap, ((N + 127) // 128) * 128)
    tile = max(128, (t // 128) * 128)

    n_blocks = pl.cdiv(N, tile)

    kernel = functools.partial(_focal_loss_kernel, alpha=alpha, gamma=gamma,
                               n_valid=N, multicore=num_cores > 1)

    if num_cores > 1:
        # v7x: map the leading axis onto the chip's TensorCores.
        n_inner = pl.cdiv(n_blocks, num_cores)
        grid = (num_cores, n_inner)

        def in_idx(c, i):
            return (0, jnp.minimum(c * n_inner + i, n_blocks - 1))

        out_idx = lambda c, i: (c, 0, 0)
        out_block = (None, 1, 1)
        out_dims = (num_cores, 1, 1)
        dim_sem = (pltpu.CORE_PARALLEL, pltpu.ARBITRARY)
    else:
        # v5e/v6e: single TensorCore -> plain 1-D reduction grid.
        grid = (n_blocks,)
        in_idx = lambda i: (0, i)
        out_idx = lambda i: (0, 0)
        out_block = (1, 1)
        out_dims = (1, 1)
        dim_sem = ("arbitrary",)

    compiler_kwargs = dict(dimension_semantics=dim_sem)
    if bytes_per_lane * tile > 14 * 1024 * 1024:
        # Only raise the scoped-VMEM limit when large tiles actually need it.
        compiler_kwargs["vmem_limit_bytes"] = 32 * 1024 * 1024

    out_loc, out_conf, out_npos = pl.pallas_call(
        kernel,
        out_shape=(
            jax.ShapeDtypeStruct(out_dims, jnp.float32),
            jax.ShapeDtypeStruct(out_dims, jnp.float32),
            jax.ShapeDtypeStruct(out_dims, jnp.float32),
        ),
        grid_spec=pltpu.PrefetchScalarGridSpec(
            num_scalar_prefetch=0,
            grid=grid,
            in_specs=[
                pl.BlockSpec((4, tile), in_idx),
                pl.BlockSpec((4, tile), in_idx),
                pl.BlockSpec((C, tile), in_idx),
                pl.BlockSpec((1, tile), in_idx),
            ],
            out_specs=[
                pl.BlockSpec(out_block, out_idx),
                pl.BlockSpec(out_block, out_idx),
                pl.BlockSpec(out_block, out_idx),
            ],
            scratch_shapes=[
                pltpu.VMEM((4, tile), jnp.float32),   # loc partials (per lane)
                pltpu.VMEM((1, tile), jnp.float32),   # conf partials
                pltpu.VMEM((1, tile), jnp.float32),   # n_pos partials
            ],
        ),
        compiler_params=pltpu.CompilerParams(**compiler_kwargs),
    )(xloc_fm, loc_fm, xconf_fm, label_fm)

    n = jnp.maximum(jnp.sum(out_npos), 0.001)
    return jnp.sum(out_loc) / n, jnp.sum(out_conf) / n


def focal_loss(xloc, xconf, loc, label, *, alpha=ALPHA, gamma=GAMMA,
               tile=None, num_cores=1):
    """Module-signature adapter: xloc/loc (B,A,4), xconf (B,A,C), label (B,A).

    NOTE: this path pays one HBM relayout to feature-major layout; for a
    bandwidth-bound loss that relayout is the dominant cost.  Producers that
    can emit (4,N)/(C,N) directly should call focal_loss_feature_major().
    """
    B, A, C = xconf.shape
    N = B * A
    xloc_fm = xloc.reshape(N, 4).T
    loc_fm = loc.reshape(N, 4).T
    xconf_fm = xconf.reshape(N, C).T
    label_fm = label.reshape(N)
    return focal_loss_feature_major(xloc_fm, xconf_fm, loc_fm, label_fm,
                                    alpha=alpha, gamma=gamma, tile=tile,
                                    num_cores=num_cores)


def focal_loss_reference(xloc, xconf, loc, label, *, alpha=ALPHA, gamma=GAMMA):
    """Pure-JAX reference mirroring the PyTorch FocalLoss.forward."""
    pos = label > 0
    neg = label == 0
    diff = xloc - loc
    absd = jnp.abs(diff)
    sl1 = jnp.where(absd < 1.0, 0.5 * diff * diff, absd - 0.5)
    loc_loss = jnp.sum(sl1 * pos[..., None].astype(jnp.float32))

    logp_all = jax.nn.log_softmax(xconf, axis=-1)
    t = jnp.clip(label, 0, xconf.shape[-1] - 1)
    logp = jnp.take_along_axis(logp_all, t[..., None], axis=-1)[..., 0]
    fl = -((1.0 - jnp.exp(logp)) ** gamma) * logp
    pos_fl = jnp.sum(fl * pos.astype(jnp.float32))
    neg_fl = jnp.sum(fl * neg.astype(jnp.float32))

    n = jnp.maximum(jnp.sum(pos.astype(jnp.float32)), 0.001)
    return loc_loss / n, (alpha * pos_fl + (1.0 - alpha) * neg_fl) / n


# TODO(synk): the PyTorch module's `self.count % 1000` debug branch (printing
# pos/neg losses and MultiBoxLoss with hard-negative mining) is a host-side
# side effect and is intentionally not reproduced in the kernel path.

if __name__ == "__main__":
    B, A, C = 2, 100, 8  # batch, anchors per image, classes (class 0 = background)
    N = B * A
    key = jax.random.PRNGKey(0)
    k1, k2, k3, k4 = jax.random.split(key, 4)

    xloc = jax.random.normal(k1, (B, A, 4), dtype=jnp.float32)
    xconf = jax.random.normal(k2, (B, A, C), dtype=jnp.float32)
    loc = jax.random.normal(k3, (B, A, 4), dtype=jnp.float32)
    # labels in {-1 (ignore), 0 (background), 1..C-1 (positive classes)}
    label = jax.random.randint(k4, (B, A), minval=-1, maxval=C, dtype=jnp.int32)

    ref_loc, ref_conf = focal_loss_reference(xloc, xconf, loc, label)

    # 1) Fast path: feature-major operands, default (large, VMEM-clamped) tile.
    xloc_fm = xloc.reshape(N, 4).T
    loc_fm = loc.reshape(N, 4).T
    xconf_fm = xconf.reshape(N, C).T
    label_fm = label.reshape(N)
    loc_l, conf_l = focal_loss_feature_major(xloc_fm, xconf_fm, loc_fm, label_fm)
    jax.block_until_ready((loc_l, conf_l))
    assert jnp.allclose(loc_l, ref_loc, rtol=2e-3, atol=2e-3), (loc_l, ref_loc)
    assert jnp.allclose(conf_l, ref_conf, rtol=2e-3, atol=2e-3), (conf_l, ref_conf)

    # 2) Module-signature adapter + small tile: exercises a multi-step grid and
    #    the in-kernel ragged-tail masking (N=200 is not a multiple of 128).
    loc_l2, conf_l2 = focal_loss(xloc, xconf, loc, label, tile=128)
    jax.block_until_ready((loc_l2, conf_l2))
    assert jnp.allclose(loc_l2, ref_loc, rtol=2e-3, atol=2e-3), (loc_l2, ref_loc)
    assert jnp.allclose(conf_l2, ref_conf, rtol=2e-3, atol=2e-3), (conf_l2, ref_conf)

    print("KERNEL_OK")
</pallas_src>

<mosaic_0001>
module attributes {stable_mosaic.version = 11 : i64} {
  func.func @_focal_loss_kernel(%arg0: i32, %arg1: memref<4x256xf32, #tpu.memory_space<vmem>>, %arg2: memref<4x256xf32, #tpu.memory_space<vmem>>, %arg3: memref<8x256xf32, #tpu.memory_space<vmem>>, %arg4: memref<1x256xi32, #tpu.memory_space<vmem>>, %arg5: memref<1x1xf32, #tpu.memory_space<vmem>>, %arg6: memref<1x1xf32, #tpu.memory_space<vmem>>, %arg7: memref<1x1xf32, #tpu.memory_space<vmem>>, %arg8: memref<4x256xf32, #tpu.memory_space<vmem>>, %arg9: memref<1x256xf32, #tpu.memory_space<vmem>>, %arg10: memref<1x256xf32, #tpu.memory_space<vmem>>) attributes {dimension_semantics = [#tpu.dimension_semantics<arbitrary>], iteration_bounds = array<i64: 1>, scalar_prefetch = 0 : i64, scratch_operands = 3 : i64, tpu.core_type = #tpu.core_type<tc>, window_params = [{transform_indices = @transform_0, window_bounds = array<i64: 4, 256>}, {transform_indices = @transform_1, window_bounds = array<i64: 4, 256>}, {transform_indices = @transform_2, window_bounds = array<i64: 8, 256>}, {transform_indices = @transform_3, window_bounds = array<i64: 1, 256>}, {pipeline_mode = #tpu.pipeline_mode<synchronous>, transform_indices = @transform_4, window_bounds = array<i64: 1, 1>}, {pipeline_mode = #tpu.pipeline_mode<synchronous>, transform_indices = @transform_5, window_bounds = array<i64: 1, 1>}, {pipeline_mode = #tpu.pipeline_mode<synchronous>, transform_indices = @transform_6, window_bounds = array<i64: 1, 1>}]} {
    %c0_i32 = arith.constant 0 : i32
    %0 = arith.cmpi eq, %arg0, %c0_i32 : i32
    %1 = arith.extui %0 : i1 to i32
    %c0_i32_0 = arith.constant 0 : i32
    %2 = arith.cmpi ne, %1, %c0_i32_0 : i32
    scf.if %2 {
      %cst_41 = arith.constant 0.000000e+00 : f32
      %86 = vector.broadcast %cst_41 : f32 to vector<4x256xf32>
      %c0_42 = arith.constant 0 : index
      %c0_43 = arith.constant 0 : index
      %87 = vector.load %arg8[%c0_42, %c0_43] : memref<4x256xf32, #tpu.memory_space<vmem>>, vector<4x256xf32>
      tpu.vector_store %arg8[%c0_42, %c0_43], %86 {strides = array<i32>} : memref<4x256xf32, #tpu.memory_space<vmem>>, vector<4x256xf32>,
      %cst_44 = arith.constant 0.000000e+00 : f32
      %88 = vector.broadcast %cst_44 : f32 to vector<1x256xf32>
      %c0_45 = arith.constant 0 : index
      %c0_46 = arith.constant 0 : index
      %89 = vector.load %arg9[%c0_45, %c0_46] : memref<1x256xf32, #tpu.memory_space<vmem>>, vector<1x256xf32>
      tpu.vector_store %arg9[%c0_45, %c0_46], %88 {strides = array<i32>} : memref<1x256xf32, #tpu.memory_space<vmem>>, vector<1x256xf32>,
      %cst_47 = arith.constant 0.000000e+00 : f32
      %90 = vector.broadcast %cst_47 : f32 to vector<1x256xf32>
      %c0_48 = arith.constant 0 : index
      %c0_49 = arith.constant 0 : index
      %91 = vector.load %arg10[%c0_48, %c0_49] : memref<1x256xf32, #tpu.memory_space<vmem>>, vector<1x256xf32>
      tpu.vector_store %arg10[%c0_48, %c0_49], %90 {strides = array<i32>} : memref<1x256xf32, #tpu.memory_space<vmem>>, vector<1x256xf32>,
    } else {
    }
    %c0 = arith.constant 0 : index
    %c0_1 = arith.constant 0 : index
    %3 = vector.load %arg4[%c0, %c0_1] : memref<1x256xi32, #tpu.memory_space<vmem>>, vector<1x256xi32>
    %4 = tpu.iota {dimensions = array<i32: 1>} : vector<1x256xi32>
    %c256_i32 = arith.constant 256 : i32
    %5 = arith.muli %arg0, %c256_i32 : i32
    %6 = vector.broadcast %5 : i32 to vector<1x256xi32>
    %7 = arith.addi %6, %4 : vector<1x256xi32>
    %c200_i32 = arith.constant 200 : i32
    %8 = vector.broadcast %c200_i32 : i32 to vector<1x256xi32>
    %9 = arith.cmpi slt, %7, %8 : vector<1x256xi32>
    %c0_i32_2 = arith.constant 0 : i32
    %10 = vector.broadcast %c0_i32_2 : i32 to vector<1x256xi32>
    %11 = arith.cmpi sgt, %3, %10 : vector<1x256xi32>
    %12 = arith.andi %9, %11 : vector<1x256xi1>
    %c0_i32_3 = arith.constant 0 : i32
    %13 = vector.broadcast %c0_i32_3 : i32 to vector<1x256xi32>
    %14 = arith.cmpi eq, %3, %13 : vector<1x256xi32>
    %15 = arith.andi %9, %14 : vector<1x256xi1>
    %c0_4 = arith.constant 0 : index
    %c0_5 = arith.constant 0 : index
    %16 = vector.load %arg1[%c0_4, %c0_5] : memref<4x256xf32, #tpu.memory_space<vmem>>, vector<4x256xf32>
    %c0_6 = arith.constant 0 : index
    %c0_7 = arith.constant 0 : index
    %17 = vector.load %arg2[%c0_6, %c0_7] : memref<4x256xf32, #tpu.memory_space<vmem>>, vector<4x256xf32>
    %18 = arith.subf %16, %17 : vector<4x256xf32>
    %19 = math.absf %18 : vector<4x256xf32>
    %cst = arith.constant 1.000000e+00 : f32
    %20 = vector.broadcast %cst : f32 to vector<4x256xf32>
    %21 = arith.cmpf olt, %19, %20 : vector<4x256xf32>
    %cst_8 = arith.constant 5.000000e-01 : f32
    %22 = vector.broadcast %cst_8 : f32 to vector<4x256xf32>
    %23 = arith.mulf %22, %18 : vector<4x256xf32>
    %24 = arith.mulf %23, %18 : vector<4x256xf32>
    %cst_9 = arith.constant 5.000000e-01 : f32
    %25 = vector.broadcast %cst_9 : f32 to vector<4x256xf32>
    %26 = arith.subf %19, %25 : vector<4x256xf32>
    %27 = arith.select %21, %24, %26 : vector<4x256xi1>, vector<4x256xf32>
    %c0_10 = arith.constant 0 : index
    %c0_11 = arith.constant 0 : index
    %28 = vector.load %arg8[%c0_10, %c0_11] : memref<4x256xf32, #tpu.memory_space<vmem>>, vector<4x256xf32>
    %cst_12 = arith.constant 0.000000e+00 : f32
    %29 = vector.shape_cast %12 : vector<1x256xi1> to vector<1x256xi1>
    %30 = vector.broadcast %29 : vector<1x256xi1> to vector<4x256xi1>
    %31 = vector.broadcast %cst_12 : f32 to vector<4x256xf32>
    %32 = arith.select %30, %27, %31 : vector<4x256xi1>, vector<4x256xf32>
    %33 = arith.addf %28, %32 : vector<4x256xf32>
    %c0_13 = arith.constant 0 : index
    %c0_14 = arith.constant 0 : index
    %34 = vector.load %arg8[%c0_13, %c0_14] : memref<4x256xf32, #tpu.memory_space<vmem>>, vector<4x256xf32>
    tpu.vector_store %arg8[%c0_13, %c0_14], %33 {strides = array<i32>} : memref<4x256xf32, #tpu.memory_space<vmem>>, vector<4x256xf32>,
    %c0_15 = arith.constant 0 : index
    %c0_16 = arith.constant 0 : index
    %35 = vector.load %arg3[%c0_15, %c0_16] : memref<8x256xf32, #tpu.memory_space<vmem>>, vector<8x256xf32>
    %cst_17 = arith.constant dense<0xFF800000> : vector<256xf32>
    %36 = vector.multi_reduction <maximumf>, %35, %cst_17 [0] : vector<8x256xf32> to vector<256xf32>
    %37 = vector.shape_cast %36 : vector<256xf32> to vector<1x256xf32>
    %38 = vector.broadcast %37 : vector<1x256xf32> to vector<8x256xf32>
    %39 = arith.subf %35, %38 : vector<8x256xf32>
    %40 = math.exp %39 : vector<8x256xf32>
    %cst_18 = arith.constant dense<0.000000e+00> : vector<256xf32>
    %41 = vector.multi_reduction <add>, %40, %cst_18 [0] : vector<8x256xf32> to vector<256xf32>
    %42 = vector.shape_cast %41 : vector<256xf32> to vector<1x256xf32>
    %c0_i32_19 = arith.constant 0 : i32
    %c7_i32 = arith.constant 7 : i32
    %43 = vector.broadcast %c0_i32_19 : i32 to vector<1x256xi32>
    %44 = arith.maxsi %43, %3 : vector<1x256xi32>
    %45 = vector.broadcast %c7_i32 : i32 to vector<1x256xi32>
    %46 = arith.minsi %45, %44 : vector<1x256xi32>
    %47 = tpu.iota {dimensions = array<i32: 0>} : vector<8x256xi32>
    %48 = vector.broadcast %46 : vector<1x256xi32> to vector<8x256xi32>
    %49 = arith.cmpi eq, %47, %48 : vector<8x256xi32>
    %cst_20 = arith.constant 0.000000e+00 : f32
    %50 = vector.broadcast %cst_20 : f32 to vector<8x256xf32>
    %51 = arith.select %49, %39, %50 : vector<8x256xi1>, vector<8x256xf32>
    %cst_21 = arith.constant dense<0.000000e+00> : vector<256xf32>
    %52 = vector.multi_reduction <add>, %51, %cst_21 [0] : vector<8x256xf32> to vector<256xf32>
    %53 = vector.shape_cast %52 : vector<256xf32> to vector<1x256xf32>
    %54 = math.log %42 : vector<1x256xf32>
    %55 = arith.subf %53, %54 : vector<1x256xf32>
    %56 = math.exp %55 : vector<1x256xf32>
    %cst_22 = arith.constant 1.000000e+00 : f32
    %57 = vector.broadcast %cst_22 : f32 to vector<1x256xf32>
    %58 = arith.subf %57, %56 : vector<1x256xf32>
    %cst_23 = arith.constant 1.000000e+00 : f32
    %59 = vector.broadcast %cst_23 : f32 to vector<1x256xf32>
    %60 = arith.mulf %59, %58 : vector<1x256xf32>
    %61 = arith.mulf %60, %58 : vector<1x256xf32>
    %cst_24 = arith.constant 0.000000e+00 : f32
    %62 = vector.broadcast %cst_24 : f32 to vector<1x256xf32>
    %63 = arith.subf %62, %61 : vector<1x256xf32>
    %64 = arith.mulf %63, %55 : vector<1x256xf32>
    %c0_25 = arith.constant 0 : index
    %c0_26 = arith.constant 0 : index
    %65 = vector.load %arg9[%c0_25, %c0_26] : memref<1x256xf32, #tpu.memory_space<vmem>>, vector<1x256xf32>
    %cst_27 = arith.constant 2.500000e-01 : f32
    %66 = vector.broadcast %cst_27 : f32 to vector<1x256xf32>
    %67 = arith.mulf %66, %64 : vector<1x256xf32>
    %cst_28 = arith.constant 0.000000e+00 : f32
    %68 = vector.broadcast %cst_28 : f32 to vector<1x256xf32>
    %69 = arith.select %12, %67, %68 : vector<1x256xi1>, vector<1x256xf32>
    %cst_29 = arith.constant 7.500000e-01 : f32
    %70 = vector.broadcast %cst_29 : f32 to vector<1x256xf32>
    %71 = arith.mulf %70, %64 : vector<1x256xf32>
    %cst_30 = arith.constant 0.000000e+00 : f32
    %72 = vector.broadcast %cst_30 : f32 to vector<1x256xf32>
    %73 = arith.select %15, %71, %72 : vector<1x256xi1>, vector<1x256xf32>
    %74 = arith.addf %69, %73 : vector<1x256xf32>
    %75 = arith.addf %65, %74 : vector<1x256xf32>
    %c0_31 = arith.constant 0 : index
    %c0_32 = arith.constant 0 : index
    %76 = vector.load %arg9[%c0_31, %c0_32] : memref<1x256xf32, #tpu.memory_space<vmem>>, vector<1x256xf32>
    tpu.vector_store %arg9[%c0_31, %c0_32], %75 {strides = array<i32>} : memref<1x256xf32, #tpu.memory_space<vmem>>, vector<1x256xf32>,
    %c0_33 = arith.constant 0 : index
    %c0_34 = arith.constant 0 : index
    %77 = vector.load %arg10[%c0_33, %c0_34] : memref<1x256xf32, #tpu.memory_space<vmem>>, vector<1x256xf32>
    %cst_35 = arith.constant 1.000000e+00 : f32
    %cst_36 = arith.constant 0.000000e+00 : f32
    %78 = vector.broadcast %cst_35 : f32 to vector<1x256xf32>
    %79 = vector.broadcast %cst_36 : f32 to vector<1x256xf32>
    %80 = arith.select %12, %78, %79 : vector<1x256xi1>, vector<1x256xf32>
    %81 = arith.addf %77, %80 : vector<1x256xf32>
    %c0_37 = arith.constant 0 : index
    %c0_38 = arith.constant 0 : index
    %82 = vector.load %arg10[%c0_37, %c0_38] : memref<1x256xf32, #tpu.memory_space<vmem>>, vector<1x256xf32>
    tpu.vector_store %arg10[%c0_37, %c0_38], %81 {strides = array<i32>} : memref<1x256xf32, #tpu.memory_space<vmem>>, vector<1x256xf32>,
    %c0_i32_39 = arith.constant 0 : i32
    %83 = arith.cmpi eq, %arg0, %c0_i32_39 : i32
    %84 = arith.extui %83 : i1 to i32
    %c0_i32_40 = arith.constant 0 : i32
    %85 = arith.cmpi ne, %84, %c0_i32_40 : i32
    scf.if %85 {
      %c0_41 = arith.constant 0 : index
      %c0_42 = arith.constant 0 : index
      %86 = vector.load %arg8[%c0_41, %c0_42] : memref<4x256xf32, #tpu.memory_space<vmem>>, vector<4x256xf32>
      %cst_43 = arith.constant dense<0.000000e+00> : vector<256xf32>
      %87 = vector.multi_reduction <add>, %86, %cst_43 [0] : vector<4x256xf32> to vector<256xf32>
      %88 = vector.shape_cast %87 : vector<256xf32> to vector<1x256xf32>
      %cst_44 = arith.constant dense<0.000000e+00> : vector<1xf32>
      %89 = vector.multi_reduction <add>, %88, %cst_44 [1] : vector<1x256xf32> to vector<1xf32>
      %90 = vector.shape_cast %89 : vector<1xf32> to vector<1x1xf32>
      %c0_45 = arith.constant 0 : index
      %c0_46 = arith.constant 0 : index
      %91 = vector.load %arg5[%c0_45, %c0_46] : memref<1x1xf32, #tpu.memory_space<vmem>>, vector<1x1xf32>
      tpu.vector_store %arg5[%c0_45, %c0_46], %90 {strides = array<i32>} : memref<1x1xf32, #tpu.memory_space<vmem>>, vector<1x1xf32>,
      %c0_47 = arith.constant 0 : index
      %c0_48 = arith.constant 0 : index
      %92 = vector.load %arg9[%c0_47, %c0_48] : memref<1x256xf32, #tpu.memory_space<vmem>>, vector<1x256xf32>
      %cst_49 = arith.constant dense<0.000000e+00> : vector<1xf32>
      %93 = vector.multi_reduction <add>, %92, %cst_49 [1] : vector<1x256xf32> to vector<1xf32>
      %94 = vector.shape_cast %93 : vector<1xf32> to vector<1x1xf32>
      %c0_50 = arith.constant 0 : index
      %c0_51 = arith.constant 0 : index
      %95 = vector.load %arg6[%c0_50, %c0_51] : memref<1x1xf32, #tpu.memory_space<vmem>>, vector<1x1xf32>
      tpu.vector_store %arg6[%c0_50, %c0_51], %94 {strides = array<i32>} : memref<1x1xf32, #tpu.memory_space<vmem>>, vector<1x1xf32>,
      %c0_52 = arith.constant 0 : index
      %c0_53 = arith.constant 0 : index
      %96 = vector.load %arg10[%c0_52, %c0_53] : memref<1x256xf32, #tpu.memory_space<vmem>>, vector<1x256xf32>
      %cst_54 = arith.constant dense<0.000000e+00> : vector<1xf32>
      %97 = vector.multi_reduction <add>, %96, %cst_54 [1] : vector<1x256xf32> to vector<1xf32>
      %98 = vector.shape_cast %97 : vector<1xf32> to vector<1x1xf32>
      %c0_55 = arith.constant 0 : index
      %c0_56 = arith.constant 0 : index
      %99 = vector.load %arg7[%c0_55, %c0_56] : memref<1x1xf32, #tpu.memory_space<vmem>>, vector<1x1xf32>
      tpu.vector_store %arg7[%c0_55, %c0_56], %98 {strides = array<i32>} : memref<1x1xf32, #tpu.memory_space<vmem>>, vector<1x1xf32>,
    } else {
    }
    return
  }
  func.func @transform_0(%arg0: i32) -> (i32, i32) {
    %c0_i32 = arith.constant 0 : i32
    %c0_i32_0 = arith.constant 0 : i32
    return %c0_i32, %arg0 : i32, i32
  }
  func.func @transform_1(%arg0: i32) -> (i32, i32) {
    %c0_i32 = arith.constant 0 : i32
    %c0_i32_0 = arith.constant 0 : i32
    return %c0_i32, %arg0 : i32, i32
  }
  func.func @transform_2(%arg0: i32) -> (i32, i32) {
    %c0_i32 = arith.constant 0 : i32
    %c0_i32_0 = arith.constant 0 : i32
    return %c0_i32, %arg0 : i32, i32
  }
  func.func @transform_3(%arg0: i32) -> (i32, i32) {
    %c0_i32 = arith.constant 0 : i32
    %c0_i32_0 = arith.constant 0 : i32
    return %c0_i32, %arg0 : i32, i32
  }
  func.func @transform_4(%arg0: i32) -> (i32, i32) {
    %c0_i32 = arith.constant 0 : i32
    %c0_i32_0 = arith.constant 0 : i32
    %c0_i32_1 = arith.constant 0 : i32
    return %c0_i32, %c0_i32_0 : i32, i32
  }
  func.func @transform_5(%arg0: i32) -> (i32, i32) {
    %c0_i32 = arith.constant 0 : i32
    %c0_i32_0 = arith.constant 0 : i32
    %c0_i32_1 = arith.constant 0 : i32
    return %c0_i32, %c0_i32_0 : i32, i32
  }
  func.func @transform_6(%arg0: i32) -> (i32, i32) {
    %c0_i32 = arith.constant 0 : i32
    %c0_i32_0 = arith.constant 0 : i32
    %c0_i32_1 = arith.constant 0 : i32
    return %c0_i32, %c0_i32_0 : i32, i32
  }
}

</mosaic_0001>

<llo_original>
// kernel: tpu_custom_call.1
$region0: #{tpu_custom_call.1}
  #allocation0 [shape = 'u32[]', space=smem, size = 0x4, offset = 0x4, fixed_abs, tag = 'smem constant byte address 0x4 - core index']
  #allocation1 [shape = 'u32[144,128]{1,0:T(1,128)}', space=vmem, size = 0x12000, scoped, tag = 'internal scratch']
  #allocation2 [shape = 'f32[4,256]{1,0:T(4,128)}', space=vmem, size = 0x1000, scoped, tag = 'scratch operand']
  #allocation3 [shape = 'f32[1,256]{1,0:T(1,128)}', space=vmem, size = 0x400, scoped, tag = 'scratch operand']
  #allocation4 [shape = 'f32[1,256]{1,0:T(1,128)}', space=vmem, size = 0x400, scoped, tag = 'scratch operand']
  %s0 = inlined_call_operand.hbm [shape: f32[4,200], index: 0, kind: input, shape index: {}]
  %s1 = inlined_call_operand.hbm [shape: f32[4,200], index: 1, kind: input, shape index: {}]
  %s2 = inlined_call_operand.hbm [shape: f32[8,200], index: 2, kind: input, shape index: {}]
  %s3 = inlined_call_operand.vmem [shape: s32[1,200], index: 3, kind: input, shape index: {}]
  %s4 = inlined_call_operand.hbm [shape: f32[1,1], index: 4, kind: output, shape index: {0}]
  %s5 = inlined_call_operand.hbm [shape: f32[1,1], index: 5, kind: output, shape index: {1}]
  %s6 = inlined_call_operand.hbm [shape: f32[1,1], index: 6, kind: output, shape index: {2}]
  %7 = xla_tuple %s4, %s5, %s6
  %s8 = sld [smem:[#allocation0]]
  $region62: #{tpu_custom_call.1} parent=0
    _
  %s10 = ssub.s32 1, %s8
  %s11 = scalar_select 0, %s10, %s8
  $region1: #{tpu_custom_call.1} parent=0
    #allocation5 [shape = 'u8[4096]{0}', space=vmem, size = 0x1000, scoped, tag = 'input window, operand 0, single buffered']
    #allocation6 [shape = 's32[1]{0}', space=sflag, size = 0x4, scoped, tag = 'scoped memory for tpu_custom_call.1']
    #allocation7 [shape = 's32[1]{0}', space=sflag, size = 0x4, scoped, tag = 'scoped memory for tpu_custom_call.1']
    #allocation8 [shape = 'u8[4096]{0}', space=vmem, size = 0x1000, scoped, tag = 'input window, operand 1, single buffered']
    #allocation9 [shape = 's32[1]{0}', space=sflag, size = 0x4, scoped, tag = 'scoped memory for tpu_custom_call.1']
    #allocation10 [shape = 'u8[8192]{0}', space=vmem, size = 0x2000, scoped, tag = 'input window, operand 2, single buffered']
    #allocation11 [shape = 'u8[512]{0}', space=vmem, size = 0x400, scoped, tag = 'output window, operand 0, single buffered']
    #allocation12 [shape = 'u8[512]{0}', space=vmem, size = 0x400, scoped, tag = 'output window, operand 1, single buffered']
    #allocation13 [shape = 's32[1]{0}', space=sflag, size = 0x4, scoped, tag = 'scoped memory for tpu_custom_call.1']
    #allocation14 [shape = 'u8[512]{0}', space=vmem, size = 0x400, scoped, tag = 'output window, operand 2, single buffered']
    %12 = vsyncpa [#allocation6], 0
    %13 = vsyncpa [#allocation9], 0
    %14 = vsyncpa [#allocation7], 0
    %15 = vsyncpa [#allocation13], 0
    // Predicated region
    $region2: #{tpu_custom_call.1} parent=1 // pred_check
      _
    $region3: #{tpu_custom_call.1} parent=1 // pred_check_branch
      %17 = sbr.rel (0) target = $region5
    $region4: #{tpu_custom_call.1} parent=1 // pred_region
      %s19 = ssub.s32 128, 128
      %20 = vsyncadd [#allocation6], %s19
      %s22 = sshll.u32 [#allocation5], 4
      %s23 = int_to_ptr.vmem [resolvable:$true] %s22
      %25 = dma.hbm_to_vmem [thread:$0]  %s0, 128, %s23, [#allocation6]
    $region5: #{tpu_custom_call.1} parent=1 // pred_fallthru
      _
    // Predicated region
    $region6: #{tpu_custom_call.1} parent=1 // pred_check
      _
    $region7: #{tpu_custom_call.1} parent=1 // pred_check_branch
      %27 = sbr.rel (0) target = $region9
    $region8: #{tpu_custom_call.1} parent=1 // pred_region
      %s29 = ssub.s32 128, 128
      %30 = vsyncadd [#allocation9], %s29
      %s32 = sshll.u32 [#allocation8], 4
      %s33 = int_to_ptr.vmem [resolvable:$true] %s32
      %35 = dma.hbm_to_vmem [thread:$0]  %s1, 128, %s33, [#allocation9]
    $region9: #{tpu_custom_call.1} parent=1 // pred_fallthru
      _
    // Predicated region
    $region10: #{tpu_custom_call.1} parent=1 // pred_check
      _
    $region11: #{tpu_custom_call.1} parent=1 // pred_check_branch
      %37 = sbr.rel (0) target = $region13
    $region12: #{tpu_custom_call.1} parent=1 // pred_region
      %s39 = ssub.s32 256, 256
      %40 = vsyncadd [#allocation9], %s39
      %s42 = sshll.u32 [#allocation10], 4
      %s43 = int_to_ptr.vmem [resolvable:$true] %s42
      %45 = dma.hbm_to_vmem [thread:$0]  %s2, 256, %s43, [#allocation9]
    $region13: #{tpu_custom_call.1} parent=1 // pred_fallthru
      _
    // Predicated region
    $region14: #{tpu_custom_call.1} parent=1 // pred_check
      _
    $region15: #{tpu_custom_call.1} parent=1 // pred_check_branch
      %47 = sbr.rel (0) target = $region17
    $region16: #{tpu_custom_call.1} parent=1 // pred_region
      _
    $region17: #{tpu_custom_call.1} parent=1 // pred_fallthru
      _
    // Predicated region
    $region18: #{tpu_custom_call.1} parent=1 // pred_check
      _
    $region19: #{tpu_custom_call.1} parent=1 // pred_check_branch
      %49 = sbr.rel (0) target = $region21
    $region20: #{tpu_custom_call.1} parent=1 // pred_region
      %50 = dma.done [#allocation6], 128
    $region21: #{tpu_custom_call.1} parent=1 // pred_fallthru
      _
    // Predicated region
    $region22: #{tpu_custom_call.1} parent=1 // pred_check
      _
    $region23: #{tpu_custom_call.1} parent=1 // pred_check_branch
      %52 = sbr.rel (0) target = $region25
    $region24: #{tpu_custom_call.1} parent=1 // pred_region
      %53 = dma.done [#allocation9], 128
    $region25: #{tpu_custom_call.1} parent=1 // pred_fallthru
      _
    // Predicated region
    $region26: #{tpu_custom_call.1} parent=1 // pred_check
      _
    $region27: #{tpu_custom_call.1} parent=1 // pred_check_branch
      %55 = sbr.rel (0) target = $region29
    $region28: #{tpu_custom_call.1} parent=1 // pred_region
      %56 = dma.done [#allocation9], 256
    $region29: #{tpu_custom_call.1} parent=1 // pred_fallthru
      _
    %p57 = scmp.eq.s32.totalorder 0, 0
    // Predicated region
    $region30: #{tpu_custom_call.1} parent=1 // pred_check
      %p58 = pneg %p57
    $region31: #{tpu_custom_call.1} parent=1 // pred_check_branch
      %60 = sbr.rel (%p58) target = $region33
    $region32: #{tpu_custom_call.1} parent=1 // pred_region
      %61 = vst [vmem:[#allocation2] sm:$0xff] 0.0
      %v62 = vlaneseq
      %vm63 = vcmp.ge.s32.totalorder %v62, 0
      %vm64 = vcmp.lt.s32.totalorder %v62, 256
      %vm65 = vmand %vm63, %vm64
      %66 = vst.msk [vmem:[#allocation3] sm:$0x3] %vm65, 0.0
      %67 = vst.msk [vmem:[#allocation4] sm:$0x3] %vm65, 0.0
    $region33: #{tpu_custom_call.1} parent=1 // pred_fallthru
      _
    %v68 = vld [vmem:[%s3] sm:$0x3]
    %v69 = vlaneseq
    %v70 = vand.u32 %v69, 127
    %v71 = vadd.s32 %v70, 128
    %s72 = smul.u32 0, 256
    %v73 = vstv %s72
    %v74 = vadd.s32 %v73, %v70
    %v75 = vadd.s32 %v73, %v71
    %vm76 = vcmp.lt.s32.totalorder %v74, 200
    %vm77 = vcmp.lt.s32.totalorder %v75, 200
    %vm78 = vcmp.gt.s32.totalorder %v68, 0
    %v79 = vsel %vm78, 1, 0
    %v80 = vlaneseq
    %v81 = vshrl.u32 %v80, 7
    %v82 = vsub.s32 0, %v81
    %v83 = vrot.slane %v79, %v82
    %v84 = vlaneseq
    %v85 = vshrl.u32 %v84, 7
    %v86 = vsub.s32 1, %v85
    %v87 = vrot.slane %v79, %v86
    %vm88 = vcmp.ne.s32.totalorder %v83, 0
    %vm89 = vcmp.ne.s32.totalorder %v87, 0
    %vm90 = vmand %vm76, %vm88
    %vm91 = vmand %vm77, %vm89
    %vm92 = vcmp.eq.s32.totalorder %v68, 0
    %v93 = vsel %vm92, 1, 0
    %v94 = vlaneseq
    %v95 = vshrl.u32 %v94, 7
    %v96 = vsub.s32 0, %v95
    %v97 = vrot.slane %v93, %v96
    %v98 = vlaneseq
    %v99 = vshrl.u32 %v98, 7
    %v100 = vsub.s32 1, %v99
    %v101 = vrot.slane %v93, %v100
    %vm102 = vcmp.ne.s32.totalorder %v97, 0
    %vm103 = vcmp.ne.s32.totalorder %v101, 0
    %vm104 = vmand %vm76, %vm102
    %vm105 = vmand %vm77, %vm103
    %v106 = vld [vmem:[#allocation5] sm:$0xff]
    %v107 = vld [vmem:[#allocation8] sm:$0xff]
    %v108 = vsub.f32 %v106, %v107
    %v109 = vand.u32 2147483647, %v108
    %vm110 = vcmp.lt.f32.partialorder %v109, 1.0
    %v111 = vmul.f32 %v108, 0.5
    %v112 = vmul.f32 %v111, %v108
    %v113 = vsub.f32 %v109, 0.5
    %v114 = vsel %vm110, %v112, %v113
    %v115 = vld [vmem:[#allocation2] sm:$0xff]
    %v116 = vsel %vm90, 1, 0
    %v117 = vsel %vm91, 1, 0
    %v118 = vlaneseq
    %v119 = vshrl.u32 %v118, 7
    %v120 = vsub.s32 0, %v119
    %v121 = vrot.slane %v116, %v120
    %v122 = vlaneseq
    %v123 = vshrl.u32 %v122, 7
    %v124 = vsub.s32 0, %v123
    %v125 = vrot.slane %v117, %v124
    %vm126 = vcmp.eq.s32.totalorder %v121, 1
    %vm127 = vcmp.eq.s32.totalorder %v125, 1
    %v129 = vcombine.high %v114, %v114
    %v131 = vsel %vm126, %v114, 0.0
    %v132 = vsel %vm127, %v129, 0.0
    %v135 = vcombine.low %v131, %v132
    %v137 = vadd.f32 %v115, %v135
    %138 = vst [vmem:[#allocation2] sm:$0xff] %v137
    %v139 = vld [vmem:[#allocation10] sm:$0xff]
    %v140 = vld [vmem:[#allocation10 + $0x8] sm:$0xff]
    %v141 = vrot.slane %v139, 4
    %v142 = vmax.f32 %v139, %v141
    %v143 = vrot.slane %v142, 2
    %v144 = vmax.f32 %v142, %v143
    %v145 = vrot.slane %v144, 1
    %v146 = vmax.f32 %v144, %v145
    %v147 = vrot.slane %v140, 4
    %v148 = vmax.f32 %v140, %v147
    %v149 = vrot.slane %v148, 2
    %v150 = vmax.f32 %v148, %v149
    %v151 = vrot.slane %v150, 1
    %v152 = vmax.f32 %v150, %v151
    %v153 = vsub.f32 %v139, %v146
    %v154 = vsub.f32 %v140, %v152
    %v155 = vmul.f32 %v153, 1.442695
    %v156 = vpow.pop %v155
    %v157 = vmul.f32 %v154, 1.442695
    %v158 = vpow.pop %v157
    %v159 = vrot.slane %v156, 4
    %v160 = vadd.f32 %v156, %v159
    %v161 = vrot.slane %v160, 2
    %v162 = vadd.f32 %v160, %v161
    %v163 = vrot.slane %v162, 1
    %v164 = vadd.f32 %v162, %v163
    %v165 = vrot.slane %v158, 4
    %v166 = vadd.f32 %v158, %v165
    %v167 = vrot.slane %v166, 2
    %v168 = vadd.f32 %v166, %v167
    %v169 = vrot.slane %v168, 1
    %v170 = vadd.f32 %v168, %v169
    %vm171 = vcmp.gt.s32.totalorder %v68, 0
    %v172 = vsel %vm171, %v68, 0
    %vm173 = vcmp.lt.s32.totalorder %v172, 7
    %v174 = vsel %vm173, %v172, 7
    %v175 = vlaneseq
    %v176 = vshrl.u32 %v175, 7
    %v177 = vlaneseq
    %v178 = vshrl.u32 %v177, 7
    %v179 = vsub.s32 0, %v178
    %v180 = vrot.slane %v174, %v179
    %v181 = vlaneseq
    %v182 = vshrl.u32 %v181, 7
    %v183 = vsub.s32 1, %v182
    %v184 = vrot.slane %v174, %v183
    %vm185 = vcmp.eq.s32.totalorder %v176, %v180
    %vm186 = vcmp.eq.s32.totalorder %v176, %v184
    %v187 = vsel %vm185, %v153, 0.0
    %v188 = vsel %vm186, %v154, 0.0
    %v189 = vrot.slane %v187, 4
    %v190 = vadd.f32 %v187, %v189
    %v191 = vrot.slane %v190, 2
    %v192 = vadd.f32 %v190, %v191
    %v193 = vrot.slane %v192, 1
    %v194 = vadd.f32 %v192, %v193
    %v195 = vrot.slane %v188, 4
    %v196 = vadd.f32 %v188, %v195
    %v197 = vrot.slane %v196, 2
    %v198 = vadd.f32 %v196, %v197
    %v199 = vrot.slane %v198, 1
    %v200 = vadd.f32 %v198, %v199
    %v201 = vlog2.pop %v164
    %v202 = vmul.f32 %v201, 0.6931472
    %v203 = vlog2.pop %v170
    %v204 = vmul.f32 %v203, 0.6931472
    %v205 = vsub.f32 %v194, %v202
    %v206 = vsub.f32 %v200, %v204
    %v207 = vmul.f32 %v205, 1.442695
    %v208 = vpow.pop %v207
    %v209 = vmul.f32 %v206, 1.442695
    %v210 = vpow.pop %v209
    %v211 = vsub.f32 1.0, %v208
    %v212 = vsub.f32 1.0, %v210
    %v213 = vmul.f32 %v211, %v211
    %v214 = vmul.f32 %v212, %v212
    %v215 = vsub.f32 0.0, %v213
    %v216 = vsub.f32 0.0, %v214
    %v217 = vmul.f32 %v215, %v205
    %v218 = vmul.f32 %v216, %v206
    %v219 = vld [vmem:[#allocation3] sm:$0x3]
    %v220 = vmul.f32 %v217, 0.25
    %v221 = vmul.f32 %v218, 0.25
    %v222 = vsel %vm90, %v220, 0.0
    %v223 = vsel %vm91, %v221, 0.0
    %v224 = vmul.f32 %v217, 0.75
    %v225 = vmul.f32 %v218, 0.75
    %v226 = vsel %vm104, %v224, 0.0
    %v227 = vsel %vm105, %v225, 0.0
    %v228 = vadd.f32 %v222, %v226
    %v229 = vadd.f32 %v223, %v227
    %v232 = vcombine.low %v228, %v229
    %v234 = vunpack.c.l.s4 1966171168
    %v235 = vunpack.c.0.s8 %v234
    %v236 = vlaneseq
    %v237 = vshrl.u32 %v236, 7
    %v238 = vsub.s32 %v235, %v237
    %v239 = vrot.slane %v232, %v238
    %v241 = vunpack.c.l.s4 1966171168
    %v242 = vunpack.c.0.s8 %v241
    %v243 = vlaneseq
    %v244 = vshrl.u32 %v243, 7
    %v245 = vsub.s32 %v242, %v244
    %v246 = vrot.slane %v239, %v245
    %v248 = vadd.f32 %v219, %v246
    %v249 = vlaneseq
    %vm250 = vcmp.ge.s32.totalorder %v249, 0
    %vm251 = vcmp.lt.s32.totalorder %v249, 256
    %vm252 = vmand %vm250, %vm251
    %253 = vst.msk [vmem:[#allocation3] sm:$0x3] %vm252, %v248
    %v254 = vld [vmem:[#allocation4] sm:$0x3]
    %v255 = vsel %vm90, 1.0, 0.0
    %v256 = vsel %vm91, 1.0, 0.0
    %v259 = vcombine.low %v255, %v256
    %v261 = vunpack.c.l.s4 1966171168
    %v262 = vunpack.c.0.s8 %v261
    %v263 = vlaneseq
    %v264 = vshrl.u32 %v263, 7
    %v265 = vsub.s32 %v262, %v264
    %v266 = vrot.slane %v259, %v265
    %v268 = vunpack.c.l.s4 1966171168
    %v269 = vunpack.c.0.s8 %v268
    %v270 = vlaneseq
    %v271 = vshrl.u32 %v270, 7
    %v272 = vsub.s32 %v269, %v271
    %v273 = vrot.slane %v266, %v272
    %v275 = vadd.f32 %v254, %v273
    %276 = vst.msk [vmem:[#allocation4] sm:$0x3] %vm252, %v275
    // Predicated region
    $region34: #{tpu_custom_call.1} parent=1 // pred_check
      %p277 = pneg %p57
    $region35: #{tpu_custom_call.1} parent=1 // pred_check_branch
      %279 = sbr.rel (%p277) target = $region37
    $region36: #{tpu_custom_call.1} parent=1 // pred_region
      %v280 = vld [vmem:[#allocation2] sm:$0xff]
      %v282 = vcombine.high %v280, %v280
      %vm284 = vcmask 1043456
      %v285 = vsel %vm284, %v280, 0.0
      %v286 = vrot.slane %v285, 4
      %v287 = vadd.f32 %v285, %v286
      %v288 = vrot.slane %v287, 2
      %v289 = vadd.f32 %v287, %v288
      %v290 = vrot.slane %v289, 1
      %v291 = vadd.f32 %v289, %v290
      %v292 = vsel %vm284, %v282, 0.0
      %v293 = vrot.slane %v292, 4
      %v294 = vadd.f32 %v292, %v293
      %v295 = vrot.slane %v294, 2
      %v296 = vadd.f32 %v294, %v295
      %v297 = vrot.slane %v296, 1
      %v298 = vadd.f32 %v296, %v297
      %v299 = vadd.f32 %v291, %v298
      %300 = vadd.xlane.f32.xlu0 %v299
      %v301 = vpop.xlane.xlu0 %300
      %vm302 = vcmask 0
      %303 = vst.msk [vmem:[#allocation11] sm:$0x1] %vm302, %v301
      %v304 = vld [vmem:[#allocation3] sm:$0x3]
      %v306 = vlaneseq
      %v307 = vshrl.u32 %v306, 7
      %v308 = vsub.s32 0, %v307
      %v309 = vrot.slane %v304, %v308
      %v310 = vlaneseq
      %v311 = vshrl.u32 %v310, 7
      %v312 = vsub.s32 1, %v311
      %v313 = vrot.slane %v304, %v312
      %vm316 = vcmask 1040384
      %v317 = vsel %vm316, %v309, 0.0
      %v318 = vsel %vm316, %v313, 0.0
      %v319 = vadd.f32 %v317, %v318
      %320 = vadd.xlane.f32.xlu0 %v319
      %v321 = vpop.xlane.xlu0 %320
      %322 = vst.msk [vmem:[#allocation12] sm:$0x1] %vm302, %v321
      %v323 = vld [vmem:[#allocation4] sm:$0x3]
      %v325 = vlaneseq
      %v326 = vshrl.u32 %v325, 7
      %v327 = vsub.s32 0, %v326
      %v328 = vrot.slane %v323, %v327
      %v329 = vlaneseq
      %v330 = vshrl.u32 %v329, 7
      %v331 = vsub.s32 1, %v330
      %v332 = vrot.slane %v323, %v331
      %v335 = vsel %vm316, %v328, 0.0
      %v336 = vsel %vm316, %v332, 0.0
      %v337 = vadd.f32 %v335, %v336
      %338 = vadd.xlane.f32.xlu0 %v337
      %v339 = vpop.xlane.xlu0 %338
      %340 = vst.msk [vmem:[#allocation14] sm:$0x1] %vm302, %v339
    $region37: #{tpu_custom_call.1} parent=1 // pred_fallthru
      _
    // Predicated region
    $region38: #{tpu_custom_call.1} parent=1 // pred_check
      _
    $region39: #{tpu_custom_call.1} parent=1 // pred_check_branch
      %342 = sbr.rel (0) target = $region41
    $region40: #{tpu_custom_call.1} parent=1 // pred_region
      %s344 = ssub.s32 16, 16
      %345 = vsyncadd [#allocation7], %s344
      %s347 = sshll.u32 [#allocation11], 4
      %s348 = int_to_ptr.vmem [resolvable:$true] %s347
      %350 = dma.vmem_to_hbm [thread:$0]  %s348, 16, %s4, [#allocation7]
    $region41: #{tpu_custom_call.1} parent=1 // pred_fallthru
      _
    // Predicated region
    $region42: #{tpu_custom_call.1} parent=1 // pred_check
      _
    $region43: #{tpu_custom_call.1} parent=1 // pred_check_branch
      %352 = sbr.rel (0) target = $region45
    $region44: #{tpu_custom_call.1} parent=1 // pred_region
      %s354 = ssub.s32 16, 16
      %355 = vsyncadd [#allocation13], %s354
      %s357 = sshll.u32 [#allocation12], 4
      %s358 = int_to_ptr.vmem [resolvable:$true] %s357
      %360 = dma.vmem_to_hbm [thread:$0]  %s358, 16, %s5, [#allocation13]
    $region45: #{tpu_custom_call.1} parent=1 // pred_fallthru
      _
    // Predicated region
    $region46: #{tpu_custom_call.1} parent=1 // pred_check
      _
    $region47: #{tpu_custom_call.1} parent=1 // pred_check_branch
      %362 = sbr.rel (0) target = $region49
    $region48: #{tpu_custom_call.1} parent=1 // pred_region
      %s364 = ssub.s32 16, 16
      %365 = vsyncadd [#allocation13], %s364
      %s367 = sshll.u32 [#allocation14], 4
      %s368 = int_to_ptr.vmem [resolvable:$true] %s367
      %370 = dma.vmem_to_hbm [thread:$0]  %s368, 16, %s6, [#allocation13]
    $region49: #{tpu_custom_call.1} parent=1 // pred_fallthru
      _
    // Predicated region
    $region50: #{tpu_custom_call.1} parent=1 // pred_check
      _
    $region51: #{tpu_custom_call.1} parent=1 // pred_check_branch
      %372 = sbr.rel (0) target = $region53
    $region52: #{tpu_custom_call.1} parent=1 // pred_region
      %373 = dma.done [#allocation7], 16
    $region53: #{tpu_custom_call.1} parent=1 // pred_fallthru
      _
    // Predicated region
    $region54: #{tpu_custom_call.1} parent=1 // pred_check
      _
    $region55: #{tpu_custom_call.1} parent=1 // pred_check_branch
      %375 = sbr.rel (0) target = $region57
    $region56: #{tpu_custom_call.1} parent=1 // pred_region
      %376 = dma.done [#allocation13], 16
    $region57: #{tpu_custom_call.1} parent=1 // pred_fallthru
      _
    // Predicated region
    $region58: #{tpu_custom_call.1} parent=1 // pred_check
      _
    $region59: #{tpu_custom_call.1} parent=1 // pred_check_branch
      %378 = sbr.rel (0) target = $region61
    $region60: #{tpu_custom_call.1} parent=1 // pred_region
      %379 = dma.done [#allocation13], 16
    $region61: #{tpu_custom_call.1} parent=1 // pred_fallthru
      _
    %380 = vsyncpa [#allocation6], 1
    %381 = vsyncpa [#allocation9], 1
    %382 = vsyncpa [#allocation7], 1
    %383 = vsyncpa [#allocation13], 1

</llo_original>
